<compile_context>
chip_gen: v7x
topology: tpu7x:2x2x1
jax: 0.10.0
libtpu: 0.0.40
codegen_flags: <defaults>
</compile_context>

<pallas_src>
import jax
import jax.numpy as jnp
from jax.experimental import pallas as pl
from jax.experimental.pallas import tpu as pltpu


# Dataset constants from the PyTorch module.
_TOTAL = 2717.0
_COUNTS = (954.0, 338.0, 690.0, 735.0)


def _wce_kernel(x_ref, lab_ref, o_ref):
    """Weighted 2-class CE over 4 binary emotion heads.

    x_ref:   (b, 4, 2) float  -- logits [group, emotion, class]   (VMEM)
    lab_ref: (b, 4)    int32  -- labels in {0, 1}                  (VMEM)
    o_ref:   (1,)      f32    -- scalar loss                       (SMEM)
    """
    # Static last-dim slices of the ref; upcast (bf16 -> f32 if needed) in-kernel.
    x0 = x_ref[:, :, 0].astype(jnp.float32)        # (b, 4) class-0 logits
    x1 = x_ref[:, :, 1].astype(jnp.float32)        # (b, 4) class-1 logits
    labf = lab_ref[...].astype(jnp.float32)        # (b, 4) labels as 0.0 / 1.0

    # Per-emotion class-0 weight built from scalar literals (no captured consts).
    e = jax.lax.broadcasted_iota(jnp.int32, (1, 4), 1)
    cnt = jnp.where(e == 0, _COUNTS[0],
          jnp.where(e == 1, _COUNTS[1],
          jnp.where(e == 2, _COUNTS[2], _COUNTS[3])))
    w0 = cnt * (1.0 / _TOTAL)                      # (1, 4); class-1 weight = 1 - w0

    # 2-class NLL in binary-CE form (identical numerics to max-shifted LSE):
    #   d = x_other - x_target = (1 - 2*label) * (x1 - x0)
    #   nll = max(d, 0) + log(1 + exp(-|d|))
    d = (1.0 - 2.0 * labf) * (x1 - x0)
    nll = jnp.maximum(d, 0.0) + jnp.log(1.0 + jnp.exp(-jnp.abs(d)))

    # Per-sample class weight via FMA (no selects): w0 + label * (w1 - w0).
    wsel = w0 + labf * (1.0 - 2.0 * w0)            # (b, 4)

    num = jnp.sum(wsel * nll, axis=0, keepdims=True)   # (1, 4)
    den = jnp.sum(wsel, axis=0, keepdims=True)         # (1, 4)

    # torch.CrossEntropyLoss(weight, reduction='mean') per emotion, mean of 4.
    o_ref[0] = jnp.sum(num / den) * 0.25


@jax.jit
def iemocap_inverse_sample_count_ce_loss(outputs, labels):
    """outputs: (B*4, 2) float, labels: (B*4,) int -> scalar float32 loss."""
    assert outputs.ndim == 2 and outputs.shape[1] == 2
    assert outputs.shape[0] % 4 == 0
    assert outputs.shape[0] == labels.shape[0]
    b = outputs.shape[0] // 4

    # Free (row-major) reshapes only — no transpose / pad / cast of the logits.
    x = outputs.reshape(b, 4, 2)
    lab = labels.reshape(b, 4).astype(jnp.int32)

    out = pl.pallas_call(
        _wce_kernel,
        out_shape=jax.ShapeDtypeStruct((1,), jnp.float32),
        in_specs=[
            pl.BlockSpec(memory_space=pltpu.MemorySpace.VMEM),
            pl.BlockSpec(memory_space=pltpu.MemorySpace.VMEM),
        ],
        out_specs=pl.BlockSpec(memory_space=pltpu.MemorySpace.SMEM),
    )(x, lab)
    return out[0]


def _reference_loss(outputs, labels):
    # Pure-JAX reference mirroring torch.nn.CrossEntropyLoss semantics.
    b = outputs.shape[0] // 4
    x = outputs.reshape(b, 4, 2).astype(jnp.float32)
    lab = labels.reshape(b, 4).astype(jnp.int32)
    counts = jnp.array(_COUNTS, dtype=jnp.float32)
    w = jnp.stack([counts / _TOTAL, (_TOTAL - counts) / _TOTAL], axis=1)  # (4, 2)

    losses = []
    for e in range(4):
        logits = x[:, e, :]                       # (b, 2)
        y = lab[:, e]                             # (b,)
        logp = jax.nn.log_softmax(logits, axis=-1)
        nll = -jnp.take_along_axis(logp, y[:, None], axis=1)[:, 0]
        wy = w[e][y]
        losses.append(jnp.sum(wy * nll) / jnp.sum(wy))
    return (losses[0] + losses[1] + losses[2] + losses[3]) / 4.0


if __name__ == "__main__":
    key = jax.random.PRNGKey(0)
    k1, k2 = jax.random.split(key)
    b_groups = 8                                   # -> outputs shape (32, 2)
    outputs = jax.random.normal(k1, (b_groups * 4, 2), dtype=jnp.float32)
    labels = jax.random.randint(k2, (b_groups * 4,), 0, 2, dtype=jnp.int32)

    loss = iemocap_inverse_sample_count_ce_loss(outputs, labels)
    loss = jax.block_until_ready(loss)

    ref = _reference_loss(outputs, labels)
    assert jnp.allclose(loss, ref, rtol=1e-5, atol=1e-5), (loss, ref)
    print("KERNEL_OK")
</pallas_src>

<mosaic_0001>
module attributes {stable_mosaic.version = 11 : i64} {
  func.func @_wce_kernel(%arg0: memref<8x4x2xf32, #tpu.memory_space<vmem>>, %arg1: memref<8x4xi32, #tpu.memory_space<vmem>>, %arg2: memref<1xf32, #tpu.memory_space<smem>>) attributes {dimension_semantics = [], scalar_prefetch = 0 : i64, scratch_operands = 0 : i64, tpu.core_type = #tpu.core_type<tc>} {
    %c0 = arith.constant 0 : index
    %c0_0 = arith.constant 0 : index
    %c0_1 = arith.constant 0 : index
    %0 = vector.load %arg0[%c0, %c0_0, %c0_1] : memref<8x4x2xf32, #tpu.memory_space<vmem>>, vector<8x4x1xf32>
    %1 = vector.shape_cast %0 : vector<8x4x1xf32> to vector<8x4xf32>
    %c0_2 = arith.constant 0 : index
    %c0_3 = arith.constant 0 : index
    %c1 = arith.constant 1 : index
    %2 = vector.load %arg0[%c0_2, %c0_3, %c1] : memref<8x4x2xf32, #tpu.memory_space<vmem>>, vector<8x4x1xf32>
    %3 = vector.shape_cast %2 : vector<8x4x1xf32> to vector<8x4xf32>
    %c0_4 = arith.constant 0 : index
    %c0_5 = arith.constant 0 : index
    %4 = vector.load %arg1[%c0_4, %c0_5] : memref<8x4xi32, #tpu.memory_space<vmem>>, vector<8x4xi32>
    %5 = arith.sitofp %4 : vector<8x4xi32> to vector<8x4xf32>
    %6 = tpu.iota {dimensions = array<i32: 1>} : vector<1x4xi32>
    %c0_i32 = arith.constant 0 : i32
    %7 = vector.broadcast %c0_i32 : i32 to vector<1x4xi32>
    %8 = arith.cmpi eq, %6, %7 : vector<1x4xi32>
    %c1_i32 = arith.constant 1 : i32
    %9 = vector.broadcast %c1_i32 : i32 to vector<1x4xi32>
    %10 = arith.cmpi eq, %6, %9 : vector<1x4xi32>
    %c2_i32 = arith.constant 2 : i32
    %11 = vector.broadcast %c2_i32 : i32 to vector<1x4xi32>
    %12 = arith.cmpi eq, %6, %11 : vector<1x4xi32>
    %cst = arith.constant 6.900000e+02 : f32
    %cst_6 = arith.constant 7.350000e+02 : f32
    %13 = vector.broadcast %cst : f32 to vector<1x4xf32>
    %14 = vector.broadcast %cst_6 : f32 to vector<1x4xf32>
    %15 = arith.select %12, %13, %14 : vector<1x4xi1>, vector<1x4xf32>
    %cst_7 = arith.constant 3.380000e+02 : f32
    %16 = vector.broadcast %cst_7 : f32 to vector<1x4xf32>
    %17 = arith.select %10, %16, %15 : vector<1x4xi1>, vector<1x4xf32>
    %cst_8 = arith.constant 9.540000e+02 : f32
    %18 = vector.broadcast %cst_8 : f32 to vector<1x4xf32>
    %19 = arith.select %8, %18, %17 : vector<1x4xi1>, vector<1x4xf32>
    %cst_9 = arith.constant 3.680530e-04 : f32
    %20 = vector.broadcast %cst_9 : f32 to vector<1x4xf32>
    %21 = arith.mulf %19, %20 : vector<1x4xf32>
    %cst_10 = arith.constant 2.000000e+00 : f32
    %22 = vector.broadcast %cst_10 : f32 to vector<8x4xf32>
    %23 = arith.mulf %22, %5 : vector<8x4xf32>
    %cst_11 = arith.constant 1.000000e+00 : f32
    %24 = vector.broadcast %cst_11 : f32 to vector<8x4xf32>
    %25 = arith.subf %24, %23 : vector<8x4xf32>
    %26 = arith.subf %3, %1 : vector<8x4xf32>
    %27 = arith.mulf %25, %26 : vector<8x4xf32>
    %cst_12 = arith.constant 0.000000e+00 : f32
    %28 = vector.broadcast %cst_12 : f32 to vector<8x4xf32>
    %29 = arith.maximumf %27, %28 : vector<8x4xf32>
    %30 = math.absf %27 : vector<8x4xf32>
    %cst_13 = arith.constant 0.000000e+00 : f32
    %31 = vector.broadcast %cst_13 : f32 to vector<8x4xf32>
    %32 = arith.subf %31, %30 : vector<8x4xf32>
    %33 = math.exp %32 : vector<8x4xf32>
    %cst_14 = arith.constant 1.000000e+00 : f32
    %34 = vector.broadcast %cst_14 : f32 to vector<8x4xf32>
    %35 = arith.addf %34, %33 : vector<8x4xf32>
    %36 = math.log %35 : vector<8x4xf32>
    %37 = arith.addf %29, %36 : vector<8x4xf32>
    %cst_15 = arith.constant 2.000000e+00 : f32
    %38 = vector.broadcast %cst_15 : f32 to vector<1x4xf32>
    %39 = arith.mulf %38, %21 : vector<1x4xf32>
    %cst_16 = arith.constant 1.000000e+00 : f32
    %40 = vector.broadcast %cst_16 : f32 to vector<1x4xf32>
    %41 = arith.subf %40, %39 : vector<1x4xf32>
    %42 = vector.broadcast %41 : vector<1x4xf32> to vector<8x4xf32>
    %43 = arith.mulf %5, %42 : vector<8x4xf32>
    %44 = vector.broadcast %21 : vector<1x4xf32> to vector<8x4xf32>
    %45 = arith.addf %44, %43 : vector<8x4xf32>
    %46 = arith.mulf %45, %37 : vector<8x4xf32>
    %cst_17 = arith.constant dense<0.000000e+00> : vector<4xf32>
    %47 = vector.multi_reduction <add>, %46, %cst_17 [0] : vector<8x4xf32> to vector<4xf32>
    %48 = vector.shape_cast %47 : vector<4xf32> to vector<1x4xf32>
    %cst_18 = arith.constant dense<0.000000e+00> : vector<4xf32>
    %49 = vector.multi_reduction <add>, %45, %cst_18 [0] : vector<8x4xf32> to vector<4xf32>
    %50 = vector.shape_cast %49 : vector<4xf32> to vector<1x4xf32>
    %51 = arith.divf %48, %50 : vector<1x4xf32>
    %52 = vector.shape_cast %51 : vector<1x4xf32> to vector<1x1x4xf32>
    %cst_19 = arith.constant dense<0.000000e+00> : vector<1xf32>
    %53 = vector.multi_reduction <add>, %52, %cst_19 [1, 2] : vector<1x1x4xf32> to vector<1xf32>
    %54 = vector.shape_cast %53 : vector<1xf32> to vector<1x1x1xf32>
    %55 = vector.extract %54[0, 0, 0] : f32 from vector<1x1x1xf32>
    %cst_20 = arith.constant 2.500000e-01 : f32
    %56 = arith.mulf %55, %cst_20 : f32
    %c0_21 = arith.constant 0 : index
    %57 = memref.load %arg2[%c0_21] : memref<1xf32, #tpu.memory_space<smem>>
    memref.store %56, %arg2[%c0_21] : memref<1xf32, #tpu.memory_space<smem>>
    return
  }
}

</mosaic_0001>

<llo_original>
// kernel: iemocap_inverse_sample_count_ce_loss.1
$region0: #{iemocap_inverse_sample_count_ce_loss.1}
  #allocation0 [shape = 'u32[]', space=smem, size = 0x4, offset = 0x4, fixed_abs, tag = 'smem constant byte address 0x4 - core index']
  #allocation1 [shape = 'u32[144,128]{1,0:T(1,128)}', space=vmem, size = 0x12000, scoped, tag = 'internal scratch']
  %s0 = inlined_call_operand.vmem [shape: f32[8,4,2], index: 0, kind: input, shape index: {}]
  %s1 = inlined_call_operand.vmem [shape: s32[8,4], index: 1, kind: input, shape index: {}]
  %s2 = inlined_call_operand.hbm [shape: f32[1], index: 2, kind: output, shape index: {}]
  %s3 = sld [smem:[#allocation0]]
  $region18: #{iemocap_inverse_sample_count_ce_loss.1} parent=0
    _
  %s5 = ssub.s32 1, %s3
  %s6 = scalar_select 0, %s5, %s3
  $region1: #{iemocap_inverse_sample_count_ce_loss.1} parent=0
    #allocation2 [shape = 'u8[512]{0}', space=smem, size = 0x200, scoped, tag = 'output window, operand 0, single buffered']
    #allocation3 [shape = 's32[1]{0}', space=sflag, size = 0x4, scoped, tag = 'scoped memory for iemocap_inverse_sample_count_ce_loss.1']
    %7 = vsyncpa [#allocation3], 0
    // Predicated region
    $region2: #{iemocap_inverse_sample_count_ce_loss.1} parent=1 // pred_check
      _
    $region3: #{iemocap_inverse_sample_count_ce_loss.1} parent=1 // pred_check_branch
      %9 = sbr.rel (0) target = $region5
    $region4: #{iemocap_inverse_sample_count_ce_loss.1} parent=1 // pred_region
      _
    $region5: #{iemocap_inverse_sample_count_ce_loss.1} parent=1 // pred_fallthru
      _
    // Predicated region
    $region6: #{iemocap_inverse_sample_count_ce_loss.1} parent=1 // pred_check
      _
    $region7: #{iemocap_inverse_sample_count_ce_loss.1} parent=1 // pred_check_branch
      %11 = sbr.rel (0) target = $region9
    $region8: #{iemocap_inverse_sample_count_ce_loss.1} parent=1 // pred_region
      _
    $region9: #{iemocap_inverse_sample_count_ce_loss.1} parent=1 // pred_fallthru
      _
    %v12 = vld [vmem:[%s0] sm:$0xf]
    %v13 = vld [vmem:[%s0 + $0x4] sm:$0xf]
    %v14 = vld [vmem:[%s0 + $0x8] sm:$0xf]
    %v15 = vld [vmem:[%s0 + $0xc] sm:$0xf]
    %v16 = vld [vmem:[%s0 + $0x10] sm:$0xf]
    %v17 = vld [vmem:[%s0 + $0x14] sm:$0xf]
    %v18 = vld [vmem:[%s0 + $0x18] sm:$0xf]
    %v19 = vld [vmem:[%s0 + $0x1c] sm:$0xf]
    %v20 = vld [vmem:[%s1] sm:$0xff]
    %v21 = vcvt.s32.f32 %v20
    %v22 = vlaneseq
    %v23 = vand.u32 %v22, 127
    %vm24 = vcmp.eq.s32.totalorder %v23, 0
    %vm25 = vcmp.eq.s32.totalorder %v23, 1
    %vm26 = vcmp.eq.s32.totalorder %v23, 2
    %v27 = vsel %vm26, 690.0, 735.0
    %v28 = vsel %vm25, 338.0, %v27
    %v29 = vsel %vm24, 954.0, %v28
    %v30 = vmul.f32 %v29, 0.000368053
    %v31 = vmul.f32 %v21, 2.0
    %v32 = vsub.f32 1.0, %v31
    %41 = vrot.lane.b32.xlu0 %v12, 1
    %v42 = vpop.permute.xlu0 %41
    %43 = vrot.lane.b32.xlu0 %v13, 1
    %v44 = vpop.permute.xlu0 %43
    %45 = vrot.lane.b32.xlu0 %v14, 1
    %v46 = vpop.permute.xlu0 %45
    %47 = vrot.lane.b32.xlu0 %v15, 1
    %v48 = vpop.permute.xlu0 %47
    %49 = vrot.lane.b32.xlu0 %v16, 1
    %v50 = vpop.permute.xlu0 %49
    %51 = vrot.lane.b32.xlu0 %v17, 1
    %v52 = vpop.permute.xlu0 %51
    %53 = vrot.lane.b32.xlu0 %v18, 1
    %v54 = vpop.permute.xlu0 %53
    %55 = vrot.lane.b32.xlu0 %v19, 1
    %v56 = vpop.permute.xlu0 %55
    %v65 = vsub.f32 %v12, %v42
    %v66 = vsub.f32 %v13, %v44
    %v67 = vsub.f32 %v14, %v46
    %v68 = vsub.f32 %v15, %v48
    %v69 = vsub.f32 %v16, %v50
    %v70 = vsub.f32 %v17, %v52
    %v71 = vsub.f32 %v18, %v54
    %v72 = vsub.f32 %v19, %v56
    %81 = vset.pattern.permute.xlu0 1
    %82 = vperm.xlu0 %81, %v65
    %v83 = vpop.permute.xlu0 %82
    %84 = vset.pattern.permute.xlu0 1
    %85 = vperm.xlu0 %84, %v66
    %v86 = vpop.permute.xlu0 %85
    %87 = vset.pattern.permute.xlu0 1
    %88 = vperm.xlu0 %87, %v67
    %v89 = vpop.permute.xlu0 %88
    %90 = vset.pattern.permute.xlu0 1
    %91 = vperm.xlu0 %90, %v68
    %v92 = vpop.permute.xlu0 %91
    %93 = vset.pattern.permute.xlu0 1
    %94 = vperm.xlu0 %93, %v69
    %v95 = vpop.permute.xlu0 %94
    %96 = vset.pattern.permute.xlu0 1
    %97 = vperm.xlu0 %96, %v70
    %v98 = vpop.permute.xlu0 %97
    %99 = vset.pattern.permute.xlu0 1
    %100 = vperm.xlu0 %99, %v71
    %v101 = vpop.permute.xlu0 %100
    %102 = vset.pattern.permute.xlu0 1
    %103 = vperm.xlu0 %102, %v72
    %v104 = vpop.permute.xlu0 %103
    %v105 = vlaneseq
    %v106 = vshrl.u32 %v105, 7
    %v107 = vsub.s32 %v23, %v106
    %v108 = vrot.slane %v83, %v107
    %v109 = vlaneseq
    %v110 = vshrl.u32 %v109, 7
    %v111 = vsub.s32 %v23, %v110
    %v112 = vrot.slane %v86, %v111
    %v113 = vlaneseq
    %v114 = vshrl.u32 %v113, 7
    %v115 = vsub.s32 %v23, %v114
    %v116 = vrot.slane %v89, %v115
    %v117 = vlaneseq
    %v118 = vshrl.u32 %v117, 7
    %v119 = vsub.s32 %v23, %v118
    %v120 = vrot.slane %v92, %v119
    %v121 = vlaneseq
    %v122 = vshrl.u32 %v121, 7
    %v123 = vsub.s32 %v23, %v122
    %v124 = vrot.slane %v95, %v123
    %v125 = vlaneseq
    %v126 = vshrl.u32 %v125, 7
    %v127 = vsub.s32 %v23, %v126
    %v128 = vrot.slane %v98, %v127
    %v129 = vlaneseq
    %v130 = vshrl.u32 %v129, 7
    %v131 = vsub.s32 %v23, %v130
    %v132 = vrot.slane %v101, %v131
    %v133 = vlaneseq
    %v134 = vshrl.u32 %v133, 7
    %v135 = vsub.s32 %v23, %v134
    %v136 = vrot.slane %v104, %v135
    %vm137 = vcmask 1041409
    %v138 = vsel %vm137, %v112, %v108
    %vm139 = vcmask 1042434
    %v140 = vsel %vm139, %v116, %v138
    %vm141 = vcmask 1043459
    %v142 = vsel %vm141, %v120, %v140
    %vm143 = vcmask 1044484
    %v144 = vsel %vm143, %v124, %v142
    %vm145 = vcmask 1045509
    %v146 = vsel %vm145, %v128, %v144
    %vm147 = vcmask 1046534
    %v148 = vsel %vm147, %v132, %v146
    %vm149 = vcmask 1047559
    %v150 = vsel %vm149, %v136, %v148
    %v152 = vmul.f32 %v32, %v150
    %v153 = vmax.f32 %v152, 0.0
    %v154 = vand.u32 2147483647, %v152
    %v155 = vsub.f32 0.0, %v154
    %v156 = vmul.f32 %v155, 1.442695
    %v157 = vpow.pop %v156
    %v158 = vadd.f32 %v157, 1.0
    %v159 = vlog2.pop %v158
    %v160 = vmul.f32 %v159, 0.6931472
    %v161 = vadd.f32 %v153, %v160
    %v162 = vmul.f32 %v30, 2.0
    %v163 = vsub.f32 1.0, %v162
    %v164 = vmul.f32 %v21, %v163
    %v165 = vadd.f32 %v30, %v164
    %v166 = vmul.f32 %v165, %v161
    %vm167 = vcmask 31744
    %v168 = vsel %vm167, %v166, 0.0
    %v169 = vrot.slane %v168, 4
    %v170 = vadd.f32 %v168, %v169
    %v171 = vrot.slane %v170, 2
    %v172 = vadd.f32 %v170, %v171
    %v173 = vrot.slane %v172, 1
    %v174 = vadd.f32 %v172, %v173
    %v175 = vsel %vm167, %v165, 0.0
    %v176 = vrot.slane %v175, 4
    %v177 = vadd.f32 %v175, %v176
    %v178 = vrot.slane %v177, 2
    %v179 = vadd.f32 %v177, %v178
    %v180 = vrot.slane %v179, 1
    %v181 = vadd.f32 %v179, %v180
    %v182 = vrcp.pop %v181
    %v183 = vmul.f32 %v174, %v182
    %vm184 = vcmask 24576
    %v185 = vsel %vm184, %v183, 0.0
    %186 = vadd.xlane.f32.xlu0 %v185
    %v187 = vpop.xlane.xlu0 %186
    %v188 = vrot.slane %v187, 4
    %v189 = vadd.f32 %v187, %v188
    %v190 = vrot.slane %v189, 2
    %v191 = vadd.f32 %v189, %v190
    %v192 = vrot.slane %v191, 1
    %v193 = vadd.f32 %v191, %v192
    %s194 = vtos %v193
    %s195 = smul.f32 %s194, 0.25
    %s196 = scalar_lea.smem [#allocation2], 0
    %197 = sst [smem:[%s196]] %s195
    // Predicated region
    $region10: #{iemocap_inverse_sample_count_ce_loss.1} parent=1 // pred_check
      _
    $region11: #{iemocap_inverse_sample_count_ce_loss.1} parent=1 // pred_check_branch
      %199 = sbr.rel (0) target = $region13
    $region12: #{iemocap_inverse_sample_count_ce_loss.1} parent=1 // pred_region
      %s201 = ssub.s32 16, 16
      %202 = vsyncadd [#allocation3], %s201
      %205 = dma.smem_to_hbm [#allocation2], 16, %s2, [#allocation3]
    $region13: #{iemocap_inverse_sample_count_ce_loss.1} parent=1 // pred_fallthru
      _
    // Predicated region
    $region14: #{iemocap_inverse_sample_count_ce_loss.1} parent=1 // pred_check
      _
    $region15: #{iemocap_inverse_sample_count_ce_loss.1} parent=1 // pred_check_branch
      %207 = sbr.rel (0) target = $region17
    $region16: #{iemocap_inverse_sample_count_ce_loss.1} parent=1 // pred_region
      %208 = dma.done [#allocation3], 16
    $region17: #{iemocap_inverse_sample_count_ce_loss.1} parent=1 // pred_fallthru
      _
    %209 = sfence
    %210 = vsyncpa [#allocation3], 1

</llo_original>
